<compile_context>
chip_gen: v7x
topology: tpu7x:2x2x1
jax: 0.10.0
libtpu: 0.0.40
codegen_flags: <defaults>
</compile_context>

<pallas_src>
import jax
import jax.numpy as jnp
from jax.experimental import pallas as pl
from jax.experimental.pallas import tpu as pltpu

F_IN = 32            # input feature dim (last axis of x)
F_MID = 96           # output features of each sub-model
F_CAT = 2 * F_MID    # 192 = classifier input
F_OUT = 96           # classifier output


def ensemble_kernel(x_ref, wab_ref, bab_ref, wc_ref, bc_ref, o_ref):
    # x_ref: (TM, F_IN) tile of flattened input rows (bf16 or f32)
    x = x_ref[...]

    # Fused modelA|modelB: single MXU matmul -> (TM, 192), f32 accumulation.
    h = jnp.dot(x, wab_ref[...], preferred_element_type=jnp.float32)
    h = h + bab_ref[...]                 # bias add in f32
    h = jnp.maximum(h, jnp.float32(0.0)) # relu in f32 (matches F.relu after cat)

    # Classifier: Linear(192, 96). Cast h to the weight dtype for the MXU,
    # accumulate in f32, bias-add in f32.
    y = jnp.dot(h.astype(wc_ref.dtype), wc_ref[...],
                preferred_element_type=jnp.float32)
    y = y + bc_ref[...]
    o_ref[...] = y.astype(o_ref.dtype)


def ensemble_forward(x, params, *, tm=512, use_bf16=True):
    """x: (B, D1, D2, D3, F_IN) float32 -> (B, D1, D2, D3, F_OUT) float32."""
    wa, ba, wb, bb, wc, bc = params

    # Fuse sub-model weights wrapper-side. Order matters: A's features first,
    # then B's, matching torch.cat((outA, outB), dim=4).
    w_ab = jnp.concatenate([wa, wb], axis=1)   # (F_IN, 192)
    b_ab = jnp.concatenate([ba, bb], axis=1)   # (1, 192)   (stays f32)

    lead = x.shape[:-1]
    M = 1
    for d in lead:
        M *= d
    x2 = x.reshape(M, F_IN)

    # Row tile: multiple of 8, at most `tm`, and (when M allows) small enough
    # to keep >= 2 grid blocks so both v7x TensorCores get work.
    tm_eff = max(8, min(tm, (((M + 1) // 2) + 7) // 8 * 8))
    grid_m = pl.cdiv(M, tm_eff)
    Mp = grid_m * tm_eff
    if Mp != M:
        x2 = jnp.pad(x2, ((0, Mp - M), (0, 0)))   # padded rows discarded below

    if use_bf16:
        x2 = x2.astype(jnp.bfloat16)
        w_ab = w_ab.astype(jnp.bfloat16)
        wc_k = wc.astype(jnp.bfloat16)
    else:
        wc_k = wc

    out2 = pl.pallas_call(
        ensemble_kernel,
        out_shape=jax.ShapeDtypeStruct((Mp, F_OUT), jnp.float32),
        grid=(grid_m,),
        in_specs=[
            pl.BlockSpec((tm_eff, F_IN), lambda i: (i, 0)),    # x rows (tiled)
            pl.BlockSpec((F_IN, F_CAT), lambda i: (0, 0)),     # fused W_A|W_B
            pl.BlockSpec((1, F_CAT), lambda i: (0, 0)),        # fused bias
            pl.BlockSpec((F_CAT, F_OUT), lambda i: (0, 0)),    # W_cls
            pl.BlockSpec((1, F_OUT), lambda i: (0, 0)),        # b_cls
        ],
        out_specs=pl.BlockSpec((tm_eff, F_OUT), lambda i: (i, 0)),
        compiler_params=pltpu.CompilerParams(
            dimension_semantics=("parallel",)),
    )(x2, w_ab, b_ab, wc_k, bc)

    return out2[:M].reshape(*lead, F_OUT)


def ensemble_reference(x, params):
    wa, ba, wb, bb, wc, bc = params
    out_a = x @ wa + ba[0]
    out_b = x @ wb + bb[0]
    h = jnp.maximum(jnp.concatenate([out_a, out_b], axis=-1), 0.0)
    return h @ wc + bc[0]


def init_params(key):
    ks = jax.random.split(key, 6)
    # Stored transposed relative to PyTorch's (out, in) convention.
    wa = jax.random.normal(ks[0], (F_IN, F_MID), jnp.float32) * 0.05
    ba = jax.random.normal(ks[1], (1, F_MID), jnp.float32) * 0.05
    wb = jax.random.normal(ks[2], (F_IN, F_MID), jnp.float32) * 0.05
    bb = jax.random.normal(ks[3], (1, F_MID), jnp.float32) * 0.05
    wc = jax.random.normal(ks[4], (F_CAT, F_OUT), jnp.float32) * 0.05
    bc = jax.random.normal(ks[5], (1, F_OUT), jnp.float32) * 0.05
    return (wa, ba, wb, bb, wc, bc)


if __name__ == "__main__":
    key = jax.random.PRNGKey(0)
    k_x, k_p = jax.random.split(key)

    # 5-D input: torch.cat happens on dim=4 (the trailing feature axis).
    # M = 2*4*4*8 = 256 flattened rows -> tm_eff = 128, grid = 2.
    x = jax.random.normal(k_x, (2, 4, 4, 8, F_IN), jnp.float32)
    params = init_params(k_p)

    out = ensemble_forward(x, params)           # bf16 matmuls, f32 accumulate
    out = jax.block_until_ready(out)

    ref = ensemble_reference(x, params)
    assert out.shape == (2, 4, 4, 8, F_OUT)
    # bf16 matmul inputs with f32 accumulation: loosened tolerance per review.
    assert jnp.allclose(out, ref, atol=2e-2, rtol=2e-2), "mismatch vs reference"

    # Also sanity-check the strict-f32 path (v5e-style) at tight tolerance.
    out_f32 = jax.block_until_ready(ensemble_forward(x, params, use_bf16=False))
    assert jnp.allclose(out_f32, ref, atol=1e-5, rtol=1e-5), "f32 mismatch"

    print("KERNEL_OK")
</pallas_src>

<mosaic_0001>
module attributes {stable_mosaic.version = 11 : i64} {
  func.func @ensemble_kernel(%arg0: i32, %arg1: memref<128x32xbf16, #tpu.memory_space<vmem>>, %arg2: memref<32x192xbf16, #tpu.memory_space<vmem>>, %arg3: memref<1x192xf32, #tpu.memory_space<vmem>>, %arg4: memref<192x96xbf16, #tpu.memory_space<vmem>>, %arg5: memref<1x96xf32, #tpu.memory_space<vmem>>, %arg6: memref<128x96xf32, #tpu.memory_space<vmem>>) attributes {dimension_semantics = [#tpu.dimension_semantics<parallel>], iteration_bounds = array<i64: 2>, scalar_prefetch = 0 : i64, scratch_operands = 0 : i64, tpu.core_type = #tpu.core_type<tc>, window_params = [{transform_indices = @transform_0, window_bounds = array<i64: 128, 32>}, {pipeline_mode = #tpu.pipeline_mode<synchronous>, transform_indices = @transform_1, window_bounds = array<i64: 32, 192>}, {pipeline_mode = #tpu.pipeline_mode<synchronous>, transform_indices = @transform_2, window_bounds = array<i64: 1, 192>}, {pipeline_mode = #tpu.pipeline_mode<synchronous>, transform_indices = @transform_3, window_bounds = array<i64: 192, 96>}, {pipeline_mode = #tpu.pipeline_mode<synchronous>, transform_indices = @transform_4, window_bounds = array<i64: 1, 96>}, {transform_indices = @transform_5, window_bounds = array<i64: 128, 96>}]} {
    %c0 = arith.constant 0 : index
    %c0_0 = arith.constant 0 : index
    %0 = vector.load %arg1[%c0, %c0_0] : memref<128x32xbf16, #tpu.memory_space<vmem>>, vector<128x32xbf16>
    %c0_1 = arith.constant 0 : index
    %c0_2 = arith.constant 0 : index
    %1 = vector.load %arg2[%c0_1, %c0_2] : memref<32x192xbf16, #tpu.memory_space<vmem>>, vector<32x192xbf16>
    %cst = arith.constant dense<0.000000e+00> : vector<128x192xf32>
    %2 = tpu.matmul %0, %1, %cst {dimension_numbers = #tpu.dot_dimension_numbers<[1], [0], [0], [1], [0, 0, 1, 1], [], []>} : vector<128x32xbf16>, vector<32x192xbf16>, vector<128x192xf32> -> vector<128x192xf32>
    %c0_3 = arith.constant 0 : index
    %c0_4 = arith.constant 0 : index
    %3 = vector.load %arg3[%c0_3, %c0_4] : memref<1x192xf32, #tpu.memory_space<vmem>>, vector<1x192xf32>
    %4 = vector.broadcast %3 : vector<1x192xf32> to vector<128x192xf32>
    %5 = arith.addf %2, %4 : vector<128x192xf32>
    %cst_5 = arith.constant 0.000000e+00 : f32
    %6 = vector.broadcast %cst_5 : f32 to vector<128x192xf32>
    %7 = arith.maximumf %5, %6 : vector<128x192xf32>
    %8 = arith.truncf %7 : vector<128x192xf32> to vector<128x192xbf16>
    %c0_6 = arith.constant 0 : index
    %c0_7 = arith.constant 0 : index
    %9 = vector.load %arg4[%c0_6, %c0_7] : memref<192x96xbf16, #tpu.memory_space<vmem>>, vector<192x96xbf16>
    %cst_8 = arith.constant dense<0.000000e+00> : vector<128x96xf32>
    %10 = tpu.matmul %8, %9, %cst_8 {dimension_numbers = #tpu.dot_dimension_numbers<[1], [0], [0], [1], [0, 0, 1, 1], [], []>} : vector<128x192xbf16>, vector<192x96xbf16>, vector<128x96xf32> -> vector<128x96xf32>
    %c0_9 = arith.constant 0 : index
    %c0_10 = arith.constant 0 : index
    %11 = vector.load %arg5[%c0_9, %c0_10] : memref<1x96xf32, #tpu.memory_space<vmem>>, vector<1x96xf32>
    %12 = vector.broadcast %11 : vector<1x96xf32> to vector<128x96xf32>
    %13 = arith.addf %10, %12 : vector<128x96xf32>
    %c0_11 = arith.constant 0 : index
    %c0_12 = arith.constant 0 : index
    %14 = vector.load %arg6[%c0_11, %c0_12] : memref<128x96xf32, #tpu.memory_space<vmem>>, vector<128x96xf32>
    tpu.vector_store %arg6[%c0_11, %c0_12], %13 {strides = array<i32>} : memref<128x96xf32, #tpu.memory_space<vmem>>, vector<128x96xf32>,
    return
  }
  func.func @transform_0(%arg0: i32) -> (i32, i32) {
    %c0_i32 = arith.constant 0 : i32
    %c0_i32_0 = arith.constant 0 : i32
    return %arg0, %c0_i32 : i32, i32
  }
  func.func @transform_1(%arg0: i32) -> (i32, i32) {
    %c0_i32 = arith.constant 0 : i32
    %c0_i32_0 = arith.constant 0 : i32
    %c0_i32_1 = arith.constant 0 : i32
    return %c0_i32, %c0_i32_0 : i32, i32
  }
  func.func @transform_2(%arg0: i32) -> (i32, i32) {
    %c0_i32 = arith.constant 0 : i32
    %c0_i32_0 = arith.constant 0 : i32
    %c0_i32_1 = arith.constant 0 : i32
    return %c0_i32, %c0_i32_0 : i32, i32
  }
  func.func @transform_3(%arg0: i32) -> (i32, i32) {
    %c0_i32 = arith.constant 0 : i32
    %c0_i32_0 = arith.constant 0 : i32
    %c0_i32_1 = arith.constant 0 : i32
    return %c0_i32, %c0_i32_0 : i32, i32
  }
  func.func @transform_4(%arg0: i32) -> (i32, i32) {
    %c0_i32 = arith.constant 0 : i32
    %c0_i32_0 = arith.constant 0 : i32
    %c0_i32_1 = arith.constant 0 : i32
    return %c0_i32, %c0_i32_0 : i32, i32
  }
  func.func @transform_5(%arg0: i32) -> (i32, i32) {
    %c0_i32 = arith.constant 0 : i32
    %c0_i32_0 = arith.constant 0 : i32
    return %arg0, %c0_i32 : i32, i32
  }
}

</mosaic_0001>

<llo_original>
// kernel: tpu_custom_call.1
$region0: #{tpu_custom_call.1}
  #allocation0 [shape = 'u32[]', space=smem, size = 0x4, offset = 0x4, fixed_abs, tag = 'smem constant byte address 0x4 - core index']
  #allocation1 [shape = 'u32[144,128]{1,0:T(1,128)}', space=vmem, size = 0x12000, scoped, tag = 'internal scratch']
  %s0 = inlined_call_operand.vmem [shape: bf16[256,32], index: 0, kind: input, shape index: {}]
  %s1 = inlined_call_operand.vmem [shape: bf16[32,192], index: 1, kind: input, shape index: {}]
  %s2 = inlined_call_operand.vmem [shape: f32[1,192], index: 2, kind: input, shape index: {}]
  %s3 = inlined_call_operand.vmem [shape: bf16[192,96], index: 3, kind: input, shape index: {}]
  %s4 = inlined_call_operand.vmem [shape: f32[1,96], index: 4, kind: input, shape index: {}]
  %s5 = inlined_call_operand.vmem [shape: f32[256,96], index: 5, kind: output, shape index: {}]
  %s6 = sld [smem:[#allocation0]]
  $region53: #{tpu_custom_call.1} parent=0
    _
  %s8 = ssub.s32 1, %s6
  %s9 = scalar_select 0, %s8, %s6
  loop: start=0, step=1, limit=4
  $region2: #{tpu_custom_call.1} parent=0 // loop_pre_header
    _
  $region3: #{tpu_custom_call.1} parent=0 // loop_header
    %s11 = sphi 0, %s15
    %p12 = scmp.ge.s32.totalorder %s11, 4
    %s21 = sphi 0, %s23
    %s24 = sphi 0, %s21
    %s25 = sphi 0, %s24
    %s41 = sphi 0, %s25
    %s45 = sphi 0, %s45
    %s47 = sphi 0, %s45
    %s48 = sphi 0, %s47
    %s62 = sphi 0, %s48
    %s66 = sphi 0, %s66
    %s68 = sphi 0, %s66
    %s69 = sphi 0, %s68
    %s83 = sphi 0, %s69
    %s87 = sphi 0, %s87
    %s89 = sphi 0, %s87
    %s90 = sphi 0, %s89
    %s104 = sphi 0, %s90
    %s108 = sphi 0, %s108
    %s110 = sphi 0, %s108
    %s111 = sphi 0, %s110
    %s125 = sphi 0, %s111
    %s131 = sphi 0, %s133
    %s134 = sphi 0, %s131
    %s135 = sphi 0, %s134
    %s151 = sphi 0, %s135
  $region4: #{tpu_custom_call.1} parent=0 // loop_header_branch
    %14 = sbr.rel (%p12) target = $region8
  $region5: #{tpu_custom_call.1} parent=0 // loop_body
    %s16 = ssub.s32 %s11, 1
    %s17 = ssub.s32 %s11, 2
    %s18 = sadd.s32 %s11, 1
    %s19 = ssub.s32 %s11, %s18
    %p20 = scmp.eq.s32.totalorder %s19, 0
    %s22 = sadd.s32 %s21, 1
    %s23 = scalar_select %p20, %s21, %s22
    %p26 = pneg %p20
    %p27 = scmp.eq.s32.totalorder %s11, 1
    %p28 = por %p26, %p27
    %p29 = scmp.ne.s32.totalorder %s21, %s24
    %p30 = scmp.eq.s32.totalorder %s11, 0
    %p31 = por %p29, %p30
    %p32 = scmp.ne.s32.totalorder %s21, %s24
    %p33 = scmp.eq.s32.totalorder %s16, 1
    %p34 = por %p32, %p33
    %p35 = scmp.ne.s32.totalorder %s24, %s25
    %p36 = scmp.eq.s32.totalorder %s16, 0
    %p37 = por %p35, %p36
    %p38 = scmp.ne.s32.totalorder %s24, %s25
    %p39 = scmp.eq.s32.totalorder %s17, 1
    %p40 = por %p38, %p39
    %p42 = scmp.ne.s32.totalorder %s25, %s41
    %p43 = scmp.eq.s32.totalorder %s17, 0
    %p44 = por %p42, %p43
    %s46 = sadd.s32 %s45, 1
    %p49 = scmp.eq.s32.totalorder %s11, 1
    %p50 = scmp.ne.s32.totalorder %s45, %s47
    %p51 = scmp.eq.s32.totalorder %s11, 0
    %p52 = por %p50, %p51
    %p53 = scmp.ne.s32.totalorder %s45, %s47
    %p54 = scmp.eq.s32.totalorder %s16, 1
    %p55 = por %p53, %p54
    %p56 = scmp.ne.s32.totalorder %s47, %s48
    %p57 = scmp.eq.s32.totalorder %s16, 0
    %p58 = por %p56, %p57
    %p59 = scmp.ne.s32.totalorder %s47, %s48
    %p60 = scmp.eq.s32.totalorder %s17, 1
    %p61 = por %p59, %p60
    %p63 = scmp.ne.s32.totalorder %s48, %s62
    %p64 = scmp.eq.s32.totalorder %s17, 0
    %p65 = por %p63, %p64
    %s67 = sadd.s32 %s66, 1
    %p70 = scmp.eq.s32.totalorder %s11, 1
    %p71 = scmp.ne.s32.totalorder %s66, %s68
    %p72 = scmp.eq.s32.totalorder %s11, 0
    %p73 = por %p71, %p72
    %p74 = scmp.ne.s32.totalorder %s66, %s68
    %p75 = scmp.eq.s32.totalorder %s16, 1
    %p76 = por %p74, %p75
    %p77 = scmp.ne.s32.totalorder %s68, %s69
    %p78 = scmp.eq.s32.totalorder %s16, 0
    %p79 = por %p77, %p78
    %p80 = scmp.ne.s32.totalorder %s68, %s69
    %p81 = scmp.eq.s32.totalorder %s17, 1
    %p82 = por %p80, %p81
    %p84 = scmp.ne.s32.totalorder %s69, %s83
    %p85 = scmp.eq.s32.totalorder %s17, 0
    %p86 = por %p84, %p85
    %s88 = sadd.s32 %s87, 1
    %p91 = scmp.eq.s32.totalorder %s11, 1
    %p92 = scmp.ne.s32.totalorder %s87, %s89
    %p93 = scmp.eq.s32.totalorder %s11, 0
    %p94 = por %p92, %p93
    %p95 = scmp.ne.s32.totalorder %s87, %s89
    %p96 = scmp.eq.s32.totalorder %s16, 1
    %p97 = por %p95, %p96
    %p98 = scmp.ne.s32.totalorder %s89, %s90
    %p99 = scmp.eq.s32.totalorder %s16, 0
    %p100 = por %p98, %p99
    %p101 = scmp.ne.s32.totalorder %s89, %s90
    %p102 = scmp.eq.s32.totalorder %s17, 1
    %p103 = por %p101, %p102
    %p105 = scmp.ne.s32.totalorder %s90, %s104
    %p106 = scmp.eq.s32.totalorder %s17, 0
    %p107 = por %p105, %p106
    %s109 = sadd.s32 %s108, 1
    %p112 = scmp.eq.s32.totalorder %s11, 1
    %p113 = scmp.ne.s32.totalorder %s108, %s110
    %p114 = scmp.eq.s32.totalorder %s11, 0
    %p115 = por %p113, %p114
    %p116 = scmp.ne.s32.totalorder %s108, %s110
    %p117 = scmp.eq.s32.totalorder %s16, 1
    %p118 = por %p116, %p117
    %p119 = scmp.ne.s32.totalorder %s110, %s111
    %p120 = scmp.eq.s32.totalorder %s16, 0
    %p121 = por %p119, %p120
    %p122 = scmp.ne.s32.totalorder %s110, %s111
    %p123 = scmp.eq.s32.totalorder %s17, 1
    %p124 = por %p122, %p123
    %p126 = scmp.ne.s32.totalorder %s111, %s125
    %p127 = scmp.eq.s32.totalorder %s17, 0
    %p128 = por %p126, %p127
    %s129 = ssub.s32 %s11, %s18
    %p130 = scmp.eq.s32.totalorder %s129, 0
    %s132 = sadd.s32 %s131, 1
    %s133 = scalar_select %p130, %s131, %s132
    %p136 = pneg %p130
    %p137 = scmp.eq.s32.totalorder %s11, 1
    %p138 = por %p136, %p137
    %p139 = scmp.ne.s32.totalorder %s131, %s134
    %p140 = scmp.eq.s32.totalorder %s11, 0
    %p141 = por %p139, %p140
    %p142 = scmp.ne.s32.totalorder %s131, %s134
    %p143 = scmp.eq.s32.totalorder %s16, 1
    %p144 = por %p142, %p143
    %p145 = scmp.ne.s32.totalorder %s134, %s135
    %p146 = scmp.eq.s32.totalorder %s16, 0
    %p147 = por %p145, %p146
    %p148 = scmp.ne.s32.totalorder %s134, %s135
    %p149 = scmp.eq.s32.totalorder %s17, 1
    %p150 = por %p148, %p149
    %p152 = scmp.ne.s32.totalorder %s135, %s151
    %p153 = scmp.eq.s32.totalorder %s17, 0
    %p154 = por %p152, %p153
    %p155 = scmp.le.s32.totalorder 1, %s11
    %p156 = scmp.lt.s32.totalorder %s11, 3
    %p157 = pnand %p155, %p156
    %p158 = pneg %p157
    // Predicated region
    $region9: #{tpu_custom_call.1} parent=5 // pred_check
      _
    $region10: #{tpu_custom_call.1} parent=5 // pred_check_branch
      %160 = sbr.rel (%p157) target = $region12
    $region11: #{tpu_custom_call.1} parent=5 // pred_region
      %s161 = ssub.s32 %s11, 1
      // Predicated region
      $region13: #{tpu_custom_call.1} parent=11 // pred_check
        %p162 = pneg %p58
      $region14: #{tpu_custom_call.1} parent=11 // pred_check_branch
        %164 = sbr.rel (%p162) target = $region16
      $region15: #{tpu_custom_call.1} parent=11 // pred_region
        _
      $region16: #{tpu_custom_call.1} parent=11 // pred_fallthru
        _
      // Predicated region
      $region17: #{tpu_custom_call.1} parent=11 // pred_check
        %p165 = pneg %p79
      $region18: #{tpu_custom_call.1} parent=11 // pred_check_branch
        %167 = sbr.rel (%p165) target = $region20
      $region19: #{tpu_custom_call.1} parent=11 // pred_region
        _
      $region20: #{tpu_custom_call.1} parent=11 // pred_fallthru
        _
      // Predicated region
      $region21: #{tpu_custom_call.1} parent=11 // pred_check
        %p168 = pneg %p100
      $region22: #{tpu_custom_call.1} parent=11 // pred_check_branch
        %170 = sbr.rel (%p168) target = $region24
      $region23: #{tpu_custom_call.1} parent=11 // pred_region
        _
      $region24: #{tpu_custom_call.1} parent=11 // pred_fallthru
        _
      // Predicated region
      $region25: #{tpu_custom_call.1} parent=11 // pred_check
        %p171 = pneg %p121
      $region26: #{tpu_custom_call.1} parent=11 // pred_check_branch
        %173 = sbr.rel (%p171) target = $region28
      $region27: #{tpu_custom_call.1} parent=11 // pred_region
        _
      $region28: #{tpu_custom_call.1} parent=11 // pred_fallthru
        _
    $region12: #{tpu_custom_call.1} parent=5 // pred_fallthru
      _
    %p174 = scmp.lt.s32.totalorder %s11, 2
    // Predicated region
    $region29: #{tpu_custom_call.1} parent=5 // pred_check
      %p175 = pneg %p174
    $region30: #{tpu_custom_call.1} parent=5 // pred_check_branch
      %177 = sbr.rel (%p175) target = $region32
    $region31: #{tpu_custom_call.1} parent=5 // pred_region
      // Predicated region
      $region33: #{tpu_custom_call.1} parent=31 // pred_check
        %p178 = pneg %p31
      $region34: #{tpu_custom_call.1} parent=31 // pred_check_branch
        %180 = sbr.rel (%p178) target = $region36
      $region35: #{tpu_custom_call.1} parent=31 // pred_region
        %s181 = smul.u32 16, %s11
        %p182 = scmp.lt.s32.totalorder %s181, 31
        %s183 = scalar_select %p182, %s181, 31
        %s184 = smul.addr %s183, 4
        %s185 = scalar_lea.vmem %s0, %s184
        %s186 = smul.u32 16, %s11
      $region36: #{tpu_custom_call.1} parent=31 // pred_fallthru
        _
    $region32: #{tpu_custom_call.1} parent=5 // pred_fallthru
      _
    %p187 = scmp.le.s32.totalorder 1, %s11
    %p188 = scmp.lt.s32.totalorder %s11, 3
    %p189 = pnand %p187, %p188
    %p190 = pneg %p189
    // Predicated region
    $region37: #{tpu_custom_call.1} parent=5 // pred_check
      _
    $region38: #{tpu_custom_call.1} parent=5 // pred_check_branch
      %192 = sbr.rel (%p189) target = $region40
    $region39: #{tpu_custom_call.1} parent=5 // pred_region
      %s193 = ssub.s32 %s11, 1
      %s194 = smul.u32 16, %s16
      %p195 = scmp.lt.s32.totalorder %s194, 31
      %s196 = scalar_select %p195, %s194, 31
      %s197 = smul.addr %s196, 4
      %s198 = scalar_lea.vmem %s0, %s197
      %p199 = pneg %p37
      %p200 = pneg %p34
      %p201 = pneg %p58
      %p202 = pneg %p55
      %p203 = pneg %p79
      %p204 = pneg %p76
      %p205 = pneg %p100
      %p206 = pneg %p97
      %p207 = pneg %p121
      %p208 = pneg %p118
      %p209 = pneg %p147
      %p210 = pneg %p144
      %s211 = smul.u32 16, %s16
      %p212 = scmp.lt.s32.totalorder %s211, 31
      %s213 = scalar_select %p212, %s211, 31
      %s214 = smul.addr %s213, 8
      %s215 = scalar_lea.vmem %s5, %s214
      %s216 = smul.u32 16, %s16
      %p217 = scmp.lt.s32.totalorder %s216, 31
      %s218 = scalar_select %p217, %s216, 31
      %s219 = smul.addr %s218, 4
      %s220 = scalar_lea.vmem %s0, %s219
      %s221 = smul.u32 16, %s16
      %s222 = smul.u32 16, %s16
      %p223 = scmp.lt.s32.totalorder %s222, 31
      %s224 = scalar_select %p223, %s222, 31
      %s225 = smul.addr %s224, 8
      %s226 = scalar_lea.vmem %s5, %s225
      %s227 = smul.u32 16, %s16
      %v229 = vld [vmem:[%s220] sm:$0xf]
      %v230 = vld [vmem:[%s220 + $0x4] sm:$0xf]
      %v231 = vld [vmem:[%s220 + $0x8] sm:$0xf]
      %v232 = vld [vmem:[%s220 + $0xc] sm:$0xf]
      %v233 = vld [vmem:[%s220 + $0x10] sm:$0xf]
      %v234 = vld [vmem:[%s220 + $0x14] sm:$0xf]
      %v235 = vld [vmem:[%s220 + $0x18] sm:$0xf]
      %v236 = vld [vmem:[%s220 + $0x1c] sm:$0xf]
      %v237 = vld [vmem:[%s220 + $0x20] sm:$0xf]
      %v238 = vld [vmem:[%s220 + $0x24] sm:$0xf]
      %v239 = vld [vmem:[%s220 + $0x28] sm:$0xf]
      %v240 = vld [vmem:[%s220 + $0x2c] sm:$0xf]
      %v241 = vld [vmem:[%s220 + $0x30] sm:$0xf]
      %v242 = vld [vmem:[%s220 + $0x34] sm:$0xf]
      %v243 = vld [vmem:[%s220 + $0x38] sm:$0xf]
      %v244 = vld [vmem:[%s220 + $0x3c] sm:$0xf]
      %v245 = vld [vmem:[%s1] sm:$0xff]
      %v246 = vld [vmem:[%s1 + $0x8] sm:$0xff]
      %v247 = vld [vmem:[%s1 + $0x10] sm:$0xff]
      %v248 = vld [vmem:[%s1 + $0x18] sm:$0xff]
      %v249 = vld [vmem:[%s2] sm:$0x3]
      %v251 = vlaneseq
      %v252 = vshrl.u32 %v251, 7
      %v253 = vsub.s32 0, %v252
      %v254 = vrot.slane %v249, %v253
      %v255 = vlaneseq
      %v256 = vshrl.u32 %v255, 7
      %v257 = vsub.s32 1, %v256
      %v258 = vrot.slane %v249, %v257
      %v277 = vunpack.c.l.b16 %v229
      %v278 = vunpack.c.l.b16 %v230
      %v279 = vunpack.c.l.b16 %v231
      %v280 = vunpack.c.l.b16 %v232
      %v281 = vunpack.c.l.b16 %v233
      %v282 = vunpack.c.l.b16 %v234
      %v283 = vunpack.c.l.b16 %v235
      %v284 = vunpack.c.l.b16 %v236
      %v285 = vunpack.c.l.b16 %v237
      %v286 = vunpack.c.l.b16 %v238
      %v287 = vunpack.c.l.b16 %v239
      %v288 = vunpack.c.l.b16 %v240
      %v289 = vunpack.c.l.b16 %v241
      %v290 = vunpack.c.l.b16 %v242
      %v291 = vunpack.c.l.b16 %v243
      %v292 = vunpack.c.l.b16 %v244
      %v293 = vpack.c.b16 %v278, %v277
      %v294 = vpack.c.b16 %v280, %v279
      %v295 = vpack.c.b16 %v282, %v281
      %v296 = vpack.c.b16 %v284, %v283
      %v297 = vpack.c.b16 %v286, %v285
      %v298 = vpack.c.b16 %v288, %v287
      %v299 = vpack.c.b16 %v290, %v289
      %v300 = vpack.c.b16 %v292, %v291
      %v305 = vunpack.c.l.b16 %v245
      %v306 = vunpack.c.h.b16 %v245
      %v307 = vunpack.c.l.b16 %v246
      %v308 = vunpack.c.h.b16 %v246
      %v309 = vunpack.c.l.b16 %v247
      %v310 = vunpack.c.h.b16 %v247
      %v311 = vunpack.c.l.b16 %v248
      %v312 = vunpack.c.h.b16 %v248
      %v313 = vpack.c.b16 %v307, %v305
      %v314 = vpack.c.b16 %v308, %v306
      %v315 = vpack.c.b16 %v311, %v309
      %v316 = vpack.c.b16 %v312, %v310
      %vm321 = vcmask 261120
      %v323 = vsel %vm321, %v293, 0
      %v326 = vsel %vm321, %v294, 0
      %v329 = vsel %vm321, %v295, 0
      %v332 = vsel %vm321, %v296, 0
      %v335 = vsel %vm321, %v297, 0
      %v338 = vsel %vm321, %v298, 0
      %v341 = vsel %vm321, %v299, 0
      %v344 = vsel %vm321, %v300, 0
      %346 = vmatprep.subr.bf16.mxu0 %v314
      %347 = vmatpush1.bf16.msra.mxu0 %v313
      %348 = vmatprep.subr.bf16.mxu0 %v316
      %349 = vmatpush1.bf16.msra.mxu0 %v315
      %350 = vmatprep.subr.bf16.mxu0 0
      %351 = vmatpush1.bf16.msra.mxu0 0
      %352 = vmatprep.subr.bf16.mxu0 0
      %353 = vmatpush1.bf16.msra.mxu0 0
      %354 = vmatprep.subr.bf16.mxu0 0
      %355 = vmatpush1.bf16.msra.mxu0 0
      %356 = vmatprep.subr.bf16.mxu0 0
      %357 = vmatpush1.bf16.msra.mxu0 0
      %358 = vmatprep.subr.bf16.mxu0 0
      %359 = vmatpush1.bf16.msra.mxu0 0
      %360 = vmatprep.subr.bf16.mxu0 0
      %361 = vmatpush1.bf16.msra.mxu0 0
      %362 = vmatprep.subr.bf16.mxu0 0
      %363 = vmatpush1.bf16.msra.mxu0 0
      %364 = vmatprep.subr.bf16.mxu0 0
      %365 = vmatpush1.bf16.msra.mxu0 0
      %366 = vmatprep.subr.bf16.mxu0 0
      %367 = vmatpush1.bf16.msra.mxu0 0
      %368 = vmatprep.subr.bf16.mxu0 0
      %369 = vmatpush1.bf16.msra.mxu0 0
      %370 = vmatprep.subr.bf16.mxu0 0
      %371 = vmatpush1.bf16.msra.mxu0 0
      %372 = vmatprep.subr.bf16.mxu0 0
      %373 = vmatpush1.bf16.msra.mxu0 0
      %374 = vmatprep.subr.bf16.mxu0 0
      %375 = vmatpush1.bf16.msra.mxu0 0
      %376 = vmatprep.subr.bf16.mxu0 0
      %377 = vmatpush1.bf16.msra.mxu0 0
      %378 = vmatprep.mubr.bf16.mxu0 0
      %379 = vmatmul.mubr.bf16.gmra.mrb[0].mxu0 %v323
      %v380 = vpop.f32.mrb[0].mxu0
      %v381 = vadd.f32 %v254, %v380
      %v382 = vpop.f32.mrb[0].mxu0
      %v383 = vadd.f32 %v258, %v382
      %v384 = vpop.f32.mrb[0].mxu0
      %v385 = vadd.f32 %v254, %v384
      %v386 = vpop.f32.mrb[0].mxu0
      %v387 = vadd.f32 %v258, %v386
      %388 = vmatprep.mubr.bf16.mxu0 0
      %389 = vmatmul.mubr.bf16.gmra.mrb[0].mxu0 %v326
      %v390 = vpop.f32.mrb[0].mxu0
      %v391 = vadd.f32 %v254, %v390
      %v392 = vpop.f32.mrb[0].mxu0
      %v393 = vadd.f32 %v258, %v392
      %v394 = vpop.f32.mrb[0].mxu0
      %v395 = vadd.f32 %v254, %v394
      %v396 = vpop.f32.mrb[0].mxu0
      %v397 = vadd.f32 %v258, %v396
      %398 = vmatprep.mubr.bf16.mxu0 0
      %399 = vmatmul.mubr.bf16.gmra.mrb[0].mxu0 %v329
      %v400 = vpop.f32.mrb[0].mxu0
      %v401 = vadd.f32 %v254, %v400
      %v402 = vpop.f32.mrb[0].mxu0
      %v403 = vadd.f32 %v258, %v402
      %v404 = vpop.f32.mrb[0].mxu0
      %v405 = vadd.f32 %v254, %v404
      %v406 = vpop.f32.mrb[0].mxu0
      %v407 = vadd.f32 %v258, %v406
      %408 = vmatprep.mubr.bf16.mxu0 0
      %409 = vmatmul.mubr.bf16.gmra.mrb[0].mxu0 %v332
      %v410 = vpop.f32.mrb[0].mxu0
      %v411 = vadd.f32 %v254, %v410
      %v412 = vpop.f32.mrb[0].mxu0
      %v413 = vadd.f32 %v258, %v412
      %v414 = vpop.f32.mrb[0].mxu0
      %v415 = vadd.f32 %v254, %v414
      %v416 = vpop.f32.mrb[0].mxu0
      %v417 = vadd.f32 %v258, %v416
      %418 = vmatprep.mubr.bf16.mxu0 0
      %419 = vmatmul.mubr.bf16.gmra.mrb[0].mxu0 %v335
      %v420 = vpop.f32.mrb[0].mxu0
      %v421 = vadd.f32 %v254, %v420
      %v422 = vpop.f32.mrb[0].mxu0
      %v423 = vadd.f32 %v258, %v422
      %v424 = vpop.f32.mrb[0].mxu0
      %v425 = vadd.f32 %v254, %v424
      %v426 = vpop.f32.mrb[0].mxu0
      %v427 = vadd.f32 %v258, %v426
      %428 = vmatprep.mubr.bf16.mxu0 0
      %429 = vmatmul.mubr.bf16.gmra.mrb[0].mxu0 %v338
      %v430 = vpop.f32.mrb[0].mxu0
      %v431 = vadd.f32 %v254, %v430
      %v432 = vpop.f32.mrb[0].mxu0
      %v433 = vadd.f32 %v258, %v432
      %v434 = vpop.f32.mrb[0].mxu0
      %v435 = vadd.f32 %v254, %v434
      %v436 = vpop.f32.mrb[0].mxu0
      %v437 = vadd.f32 %v258, %v436
      %438 = vmatprep.mubr.bf16.mxu0 0
      %439 = vmatmul.mubr.bf16.gmra.mrb[0].mxu0 %v341
      %v440 = vpop.f32.mrb[0].mxu0
      %v441 = vadd.f32 %v254, %v440
      %v442 = vpop.f32.mrb[0].mxu0
      %v443 = vadd.f32 %v258, %v442
      %v444 = vpop.f32.mrb[0].mxu0
      %v445 = vadd.f32 %v254, %v444
      %v446 = vpop.f32.mrb[0].mxu0
      %v447 = vadd.f32 %v258, %v446
      %448 = vmatprep.mubr.bf16.mxu0 0
      %449 = vmatmul.mubr.bf16.gmra.mrb[0].mxu0 %v344
      %v450 = vpop.f32.mrb[0].mxu0
      %v451 = vadd.f32 %v254, %v450
      %v452 = vpop.f32.mrb[0].mxu0
      %v453 = vadd.f32 %v258, %v452
      %v454 = vpop.f32.mrb[0].mxu0
      %v455 = vadd.f32 %v254, %v454
      %v456 = vpop.f32.mrb[0].mxu0
      %v457 = vadd.f32 %v258, %v456
      %458 = vdwg.mxu0
      %v459 = vmax.f32 %v381, 0.0
      %v460 = vmax.f32 %v383, 0.0
      %v461 = vmax.f32 %v385, 0.0
      %v462 = vmax.f32 %v387, 0.0
      %v463 = vmax.f32 %v391, 0.0
      %v464 = vmax.f32 %v393, 0.0
      %v465 = vmax.f32 %v395, 0.0
      %v466 = vmax.f32 %v397, 0.0
      %v467 = vmax.f32 %v401, 0.0
      %v468 = vmax.f32 %v403, 0.0
      %v469 = vmax.f32 %v405, 0.0
      %v470 = vmax.f32 %v407, 0.0
      %v471 = vmax.f32 %v411, 0.0
      %v472 = vmax.f32 %v413, 0.0
      %v473 = vmax.f32 %v415, 0.0
      %v474 = vmax.f32 %v417, 0.0
      %v475 = vmax.f32 %v421, 0.0
      %v476 = vmax.f32 %v423, 0.0
      %v477 = vmax.f32 %v425, 0.0
      %v478 = vmax.f32 %v427, 0.0
      %v479 = vmax.f32 %v431, 0.0
      %v480 = vmax.f32 %v433, 0.0
      %v481 = vmax.f32 %v435, 0.0
      %v482 = vmax.f32 %v437, 0.0
      %v483 = vmax.f32 %v441, 0.0
      %v484 = vmax.f32 %v443, 0.0
      %v485 = vmax.f32 %v445, 0.0
      %v486 = vmax.f32 %v447, 0.0
      %v487 = vmax.f32 %v451, 0.0
      %v488 = vmax.f32 %v453, 0.0
      %v489 = vmax.f32 %v455, 0.0
      %v490 = vmax.f32 %v457, 0.0
      %v491 = vpack.c.bf16 %v461, %v459
      %v492 = vpack.c.bf16 %v462, %v460
      %v493 = vpack.c.bf16 %v465, %v463
      %v494 = vpack.c.bf16 %v466, %v464
      %v495 = vpack.c.bf16 %v469, %v467
      %v496 = vpack.c.bf16 %v470, %v468
      %v497 = vpack.c.bf16 %v473, %v471
      %v498 = vpack.c.bf16 %v474, %v472
      %v499 = vpack.c.bf16 %v477, %v475
      %v500 = vpack.c.bf16 %v478, %v476
      %v501 = vpack.c.bf16 %v481, %v479
      %v502 = vpack.c.bf16 %v482, %v480
      %v503 = vpack.c.bf16 %v485, %v483
      %v504 = vpack.c.bf16 %v486, %v484
      %v505 = vpack.c.bf16 %v489, %v487
      %v506 = vpack.c.bf16 %v490, %v488
      %v507 = vld [vmem:[%s3] sm:$0xf]
      %v508 = vld [vmem:[%s3 + $0x4] sm:$0xf]
      %v509 = vld [vmem:[%s3 + $0x8] sm:$0xf]
      %v510 = vld [vmem:[%s3 + $0xc] sm:$0xf]
      %v511 = vld [vmem:[%s3 + $0x10] sm:$0xf]
      %v512 = vld [vmem:[%s3 + $0x14] sm:$0xf]
      %v513 = vld [vmem:[%s3 + $0x18] sm:$0xf]
      %v514 = vld [vmem:[%s3 + $0x1c] sm:$0xf]
      %v515 = vld [vmem:[%s3 + $0x20] sm:$0xf]
      %v516 = vld [vmem:[%s3 + $0x24] sm:$0xf]
      %v517 = vld [vmem:[%s3 + $0x28] sm:$0xf]
      %v518 = vld [vmem:[%s3 + $0x2c] sm:$0xf]
      %v519 = vld [vmem:[%s3 + $0x30] sm:$0xf]
      %v520 = vld [vmem:[%s3 + $0x34] sm:$0xf]
      %v521 = vld [vmem:[%s3 + $0x38] sm:$0xf]
      %v522 = vld [vmem:[%s3 + $0x3c] sm:$0xf]
      %v523 = vld [vmem:[%s3 + $0x40] sm:$0xf]
      %v524 = vld [vmem:[%s3 + $0x44] sm:$0xf]
      %v525 = vld [vmem:[%s3 + $0x48] sm:$0xf]
      %v526 = vld [vmem:[%s3 + $0x4c] sm:$0xf]
      %v527 = vld [vmem:[%s3 + $0x50] sm:$0xf]
      %v528 = vld [vmem:[%s3 + $0x54] sm:$0xf]
      %v529 = vld [vmem:[%s3 + $0x58] sm:$0xf]
      %v530 = vld [vmem:[%s3 + $0x5c] sm:$0xf]
      %v531 = vld [vmem:[%s4] sm:$0x1]
      %v533 = vlaneseq
      %v534 = vshrl.u32 %v533, 7
      %v535 = vsub.s32 0, %v534
      %v536 = vrot.slane %v531, %v535
      %v562 = vunpack.c.l.b16 %v507
      %v563 = vunpack.c.l.b16 %v508
      %v564 = vunpack.c.l.b16 %v509
      %v565 = vunpack.c.l.b16 %v510
      %v566 = vunpack.c.l.b16 %v511
      %v567 = vunpack.c.l.b16 %v512
      %v568 = vunpack.c.l.b16 %v513
      %v569 = vunpack.c.l.b16 %v514
      %v570 = vunpack.c.l.b16 %v515
      %v571 = vunpack.c.l.b16 %v516
      %v572 = vunpack.c.l.b16 %v517
      %v573 = vunpack.c.l.b16 %v518
      %v574 = vunpack.c.l.b16 %v519
      %v575 = vunpack.c.l.b16 %v520
      %v576 = vunpack.c.l.b16 %v521
      %v577 = vunpack.c.l.b16 %v522
      %v578 = vunpack.c.l.b16 %v523
      %v579 = vunpack.c.l.b16 %v524
      %v580 = vunpack.c.l.b16 %v525
      %v581 = vunpack.c.l.b16 %v526
      %v582 = vunpack.c.l.b16 %v527
      %v583 = vunpack.c.l.b16 %v528
      %v584 = vunpack.c.l.b16 %v529
      %v585 = vunpack.c.l.b16 %v530
      %v586 = vpack.c.b16 %v563, %v562
      %v587 = vpack.c.b16 %v565, %v564
      %v588 = vpack.c.b16 %v567, %v566
      %v589 = vpack.c.b16 %v569, %v568
      %v590 = vpack.c.b16 %v571, %v570
      %v591 = vpack.c.b16 %v573, %v572
      %v592 = vpack.c.b16 %v575, %v574
      %v593 = vpack.c.b16 %v577, %v576
      %v594 = vpack.c.b16 %v579, %v578
      %v595 = vpack.c.b16 %v581, %v580
      %v596 = vpack.c.b16 %v583, %v582
      %v597 = vpack.c.b16 %v585, %v584
      %vm610 = vcmask 523264
      %v612 = vsel %vm610, %v492, 0
      %v615 = vsel %vm610, %v494, 0
      %v618 = vsel %vm610, %v496, 0
      %v621 = vsel %vm610, %v498, 0
      %v624 = vsel %vm610, %v500, 0
      %v627 = vsel %vm610, %v502, 0
      %v630 = vsel %vm610, %v504, 0
      %v633 = vsel %vm610, %v506, 0
      %635 = vmatprep.subr.bf16.mxu0 0
      %636 = vmatpush1.bf16.msra.mxu0 %v586
      %637 = vmatprep.subr.bf16.mxu0 0
      %638 = vmatpush1.bf16.msra.mxu0 %v587
      %639 = vmatprep.subr.bf16.mxu0 0
      %640 = vmatpush1.bf16.msra.mxu0 %v588
      %641 = vmatprep.subr.bf16.mxu0 0
      %642 = vmatpush1.bf16.msra.mxu0 %v589
      %643 = vmatprep.subr.bf16.mxu0 0
      %644 = vmatpush1.bf16.msra.mxu0 %v590
      %645 = vmatprep.subr.bf16.mxu0 0
      %646 = vmatpush1.bf16.msra.mxu0 %v591
      %647 = vmatprep.subr.bf16.mxu0 0
      %648 = vmatpush1.bf16.msra.mxu0 %v592
      %649 = vmatprep.subr.bf16.mxu0 0
      %650 = vmatpush1.bf16.msra.mxu0 %v593
      %651 = vmatprep.subr.bf16.mxu0 0
      %652 = vmatpush1.bf16.msra.mxu0 %v594
      %653 = vmatprep.subr.bf16.mxu0 0
      %654 = vmatpush1.bf16.msra.mxu0 %v595
      %655 = vmatprep.subr.bf16.mxu0 0
      %656 = vmatpush1.bf16.msra.mxu0 %v596
      %657 = vmatprep.subr.bf16.mxu0 0
      %658 = vmatpush1.bf16.msra.mxu0 %v597
      %659 = vmatprep.subr.bf16.mxu0 0
      %660 = vmatpush1.bf16.msra.mxu0 0
      %661 = vmatprep.subr.bf16.mxu0 0
      %662 = vmatpush1.bf16.msra.mxu0 0
      %663 = vmatprep.subr.bf16.mxu0 0
      %664 = vmatpush1.bf16.msra.mxu0 0
      %665 = vmatprep.subr.bf16.mxu0 0
      %666 = vmatpush1.bf16.msra.mxu0 0
      %667 = vmatprep.mubr.bf16.mxu0 %v612
      %668 = vmatmul.mubr.bf16.gmra.mrb[0].mxu0 %v491
      %v669 = vpop.f32.mrb[0].mxu0
      %v670 = vadd.f32 %v536, %v669
      %v671 = vpop.f32.mrb[0].mxu0
      %v672 = vpop.f32.mrb[0].mxu0
      %v673 = vadd.f32 %v536, %v672
      %v674 = vpop.f32.mrb[0].mxu0
      %675 = vmatprep.mubr.bf16.mxu0 %v615
      %676 = vmatmul.mubr.bf16.gmra.mrb[0].mxu0 %v493
      %v677 = vpop.f32.mrb[0].mxu0
      %v678 = vadd.f32 %v536, %v677
      %v679 = vpop.f32.mrb[0].mxu0
      %v680 = vpop.f32.mrb[0].mxu0
      %v681 = vadd.f32 %v536, %v680
      %v682 = vpop.f32.mrb[0].mxu0
      %683 = vmatprep.mubr.bf16.mxu0 %v618
      %684 = vmatmul.mubr.bf16.gmra.mrb[0].mxu0 %v495
      %v685 = vpop.f32.mrb[0].mxu0
      %v686 = vadd.f32 %v536, %v685
      %v687 = vpop.f32.mrb[0].mxu0
      %v688 = vpop.f32.mrb[0].mxu0
      %v689 = vadd.f32 %v536, %v688
      %v690 = vpop.f32.mrb[0].mxu0
      %691 = vmatprep.mubr.bf16.mxu0 %v621
      %692 = vmatmul.mubr.bf16.gmra.mrb[0].mxu0 %v497
      %v693 = vpop.f32.mrb[0].mxu0
      %v694 = vadd.f32 %v536, %v693
      %v695 = vpop.f32.mrb[0].mxu0
      %v696 = vpop.f32.mrb[0].mxu0
      %v697 = vadd.f32 %v536, %v696
      %v698 = vpop.f32.mrb[0].mxu0
      %699 = vmatprep.mubr.bf16.mxu0 %v624
      %700 = vmatmul.mubr.bf16.gmra.mrb[0].mxu0 %v499
      %v701 = vpop.f32.mrb[0].mxu0
      %v702 = vadd.f32 %v536, %v701
      %v703 = vpop.f32.mrb[0].mxu0
      %v704 = vpop.f32.mrb[0].mxu0
      %v705 = vadd.f32 %v536, %v704
      %v706 = vpop.f32.mrb[0].mxu0
      %707 = vmatprep.mubr.bf16.mxu0 %v627
      %708 = vmatmul.mubr.bf16.gmra.mrb[0].mxu0 %v501
      %v709 = vpop.f32.mrb[0].mxu0
      %v710 = vadd.f32 %v536, %v709
      %v711 = vpop.f32.mrb[0].mxu0
      %v712 = vpop.f32.mrb[0].mxu0
      %v713 = vadd.f32 %v536, %v712
      %v714 = vpop.f32.mrb[0].mxu0
      %715 = vmatprep.mubr.bf16.mxu0 %v630
      %716 = vmatmul.mubr.bf16.gmra.mrb[0].mxu0 %v503
      %v717 = vpop.f32.mrb[0].mxu0
      %v718 = vadd.f32 %v536, %v717
      %v719 = vpop.f32.mrb[0].mxu0
      %v720 = vpop.f32.mrb[0].mxu0
      %v721 = vadd.f32 %v536, %v720
      %v722 = vpop.f32.mrb[0].mxu0
      %723 = vmatprep.mubr.bf16.mxu0 %v633
      %724 = vmatmul.mubr.bf16.gmra.mrb[0].mxu0 %v505
      %v725 = vpop.f32.mrb[0].mxu0
      %v726 = vadd.f32 %v536, %v725
      %v727 = vpop.f32.mrb[0].mxu0
      %v728 = vpop.f32.mrb[0].mxu0
      %v729 = vadd.f32 %v536, %v728
      %v730 = vpop.f32.mrb[0].mxu0
      %731 = vdwg.mxu0
      %vm732 = vcmask 785408
      %733 = vst.msk [vmem:[%s226] sm:$0xff] %vm732, %v670
      %734 = vst.msk [vmem:[%s226 + $0x8] sm:$0xff] %vm732, %v673
      %735 = vst.msk [vmem:[%s226 + $0x10] sm:$0xff] %vm732, %v678
      %736 = vst.msk [vmem:[%s226 + $0x18] sm:$0xff] %vm732, %v681
      %737 = vst.msk [vmem:[%s226 + $0x20] sm:$0xff] %vm732, %v686
      %738 = vst.msk [vmem:[%s226 + $0x28] sm:$0xff] %vm732, %v689
      %739 = vst.msk [vmem:[%s226 + $0x30] sm:$0xff] %vm732, %v694
      %740 = vst.msk [vmem:[%s226 + $0x38] sm:$0xff] %vm732, %v697
      %741 = vst.msk [vmem:[%s226 + $0x40] sm:$0xff] %vm732, %v702
      %742 = vst.msk [vmem:[%s226 + $0x48] sm:$0xff] %vm732, %v705
      %743 = vst.msk [vmem:[%s226 + $0x50] sm:$0xff] %vm732, %v710
      %744 = vst.msk [vmem:[%s226 + $0x58] sm:$0xff] %vm732, %v713
      %745 = vst.msk [vmem:[%s226 + $0x60] sm:$0xff] %vm732, %v718
      %746 = vst.msk [vmem:[%s226 + $0x68] sm:$0xff] %vm732, %v721
      %747 = vst.msk [vmem:[%s226 + $0x70] sm:$0xff] %vm732, %v726
      %748 = vst.msk [vmem:[%s226 + $0x78] sm:$0xff] %vm732, %v729
      %s749 = smul.u32 16, %s16
      %p750 = scmp.lt.s32.totalorder %s749, 31
      %s751 = scalar_select %p750, %s749, 31
      %s752 = smul.addr %s751, 8
      %s753 = scalar_lea.vmem %s5, %s752
      // Predicated region
      $region41: #{tpu_custom_call.1} parent=39 // pred_check
        %p754 = pneg %p144
      $region42: #{tpu_custom_call.1} parent=39 // pred_check_branch
        %756 = sbr.rel (%p754) target = $region44
      $region43: #{tpu_custom_call.1} parent=39 // pred_region
        %s757 = smul.u32 16, %s16
      $region44: #{tpu_custom_call.1} parent=39 // pred_fallthru
        _
    $region40: #{tpu_custom_call.1} parent=5 // pred_fallthru
      _
    %p758 = scmp.le.s32.totalorder 2, %s11
    // Predicated region
    $region45: #{tpu_custom_call.1} parent=5 // pred_check
      %p759 = pneg %p758
    $region46: #{tpu_custom_call.1} parent=5 // pred_check_branch
      %761 = sbr.rel (%p759) target = $region48
    $region47: #{tpu_custom_call.1} parent=5 // pred_region
      %s762 = ssub.s32 %s11, 2
      // Predicated region
      $region49: #{tpu_custom_call.1} parent=47 // pred_check
        %p763 = pneg %p150
      $region50: #{tpu_custom_call.1} parent=47 // pred_check_branch
        %765 = sbr.rel (%p763) target = $region52
      $region51: #{tpu_custom_call.1} parent=47 // pred_region
        %s766 = smul.u32 16, %s17
        %p767 = scmp.lt.s32.totalorder %s766, 31
        %s768 = scalar_select %p767, %s766, 31
        %s769 = smul.addr %s768, 8
        %s770 = scalar_lea.vmem %s5, %s769
      $region52: #{tpu_custom_call.1} parent=47 // pred_fallthru
        _
    $region48: #{tpu_custom_call.1} parent=5 // pred_fallthru
      _
  $region6: #{tpu_custom_call.1} parent=0 // loop_footer
    %s15 = sadd.s32 1, %s11
  $region7: #{tpu_custom_call.1} parent=0 // loop_footer_branch
    %10 = sbr.rel target = $region3
  $region8: #{tpu_custom_call.1} parent=0 // loop_exit
    _

</llo_original>
